<compile_context>
chip_gen: v7x
topology: tpu7x:2x2x1
jax: 0.10.0
libtpu: 0.0.40
codegen_flags: <defaults>
</compile_context>

<pallas_src>
import functools

import jax
import jax.numpy as jnp
from jax.experimental import pallas as pl
from jax.experimental.pallas import tpu as pltpu

LANE = 128          # TPU lane width; padded out-feature width of every layer.
BIAS_ROWS = 8       # each bias lives in row 0 of an 8-row (sublane-aligned) segment.
MAX_BATCH_TILE = 512


def _round_up(n, m):
    return ((n + m - 1) // m) * m


# ----------------------------------------------------------------------------
# Parameter init (matches nn.Linear default: U(-1/sqrt(fan_in), +1/sqrt(fan_in)))
# Weights stored as (in, out) = transpose of PyTorch's (out, in).
# ----------------------------------------------------------------------------
def init_params(key, input_size, hidden_size):
    k1, k2, k3, k4, k5, k6 = jax.random.split(key, 6)

    def lin(kw, kb, fan_in, fan_out):
        bound = 1.0 / jnp.sqrt(jnp.float32(fan_in))
        w = jax.random.uniform(kw, (fan_in, fan_out), jnp.float32, -bound, bound)
        b = jax.random.uniform(kb, (1, fan_out), jnp.float32, -bound, bound)
        return w, b

    w1, b1 = lin(k1, k2, input_size, hidden_size)
    w2, b2 = lin(k3, k4, hidden_size, hidden_size)
    w3, b3 = lin(k5, k6, hidden_size, 1)
    return (w1, b1, w2, b2, w3, b3)


# ----------------------------------------------------------------------------
# Pack all parameters into ONE lane-dense (rows, lane) f32 blob.  Row layout
# (all segment starts are multiples of 8 so in-kernel static slices stay on
# sublane boundaries):
#   [0,         in_p)            w1   padded to (in_p, lane)
#   [in_p,      in_p+8)          b1   in row 0
#   [.. ,       ..+lane)         w2   padded to (lane, lane)
#   [.. ,       ..+8)            b2   in row 0
#   [.. ,       ..+lane)         w3   padded to (lane, lane), real data in col 0
#   [.. ,       ..+8)            b3   in (0, 0)
# ----------------------------------------------------------------------------
def pack_params(params):
    w1, b1, w2, b2, w3, b3 = params
    input_size, hidden_size = w1.shape
    lane = max(LANE, _round_up(hidden_size, LANE))
    in_p = _round_up(input_size, 8)

    def blockify(a, rows):
        r, c = a.shape
        return jnp.pad(a, ((0, rows - r), (0, lane - c)))

    packed = jnp.concatenate(
        [
            blockify(w1, in_p),
            blockify(b1, BIAS_ROWS),
            blockify(w2, lane),
            blockify(b2, BIAS_ROWS),
            blockify(w3, lane),      # column 0 holds the (hidden -> 1) projection
            blockify(b3, BIAS_ROWS),
        ],
        axis=0,
    ).astype(jnp.float32)
    return packed


# ----------------------------------------------------------------------------
# Fused MLP kernel: 3 matmuls + 2 ReLUs entirely in VMEM.  All layer widths are
# padded to `lane`, so every dot is a full lane-dense MXU tile and the final
# store is an unmasked (TB, lane) vst.
# ----------------------------------------------------------------------------
def _mlp_kernel(x_ref, p_ref, o_ref, *, in_p, lane):
    off_w1 = 0
    off_b1 = in_p
    off_w2 = off_b1 + BIAS_ROWS
    off_b2 = off_w2 + lane
    off_w3 = off_b2 + BIAS_ROWS
    off_b3 = off_w3 + lane

    x = x_ref[...]                                      # (TB, in_p)
    w1 = p_ref[off_w1:off_w1 + in_p, :]                 # (in_p, lane)
    b1 = p_ref[off_b1:off_b1 + 1, :]                    # (1, lane)
    w2 = p_ref[off_w2:off_w2 + lane, :]                 # (lane, lane)
    b2 = p_ref[off_b2:off_b2 + 1, :]
    w3 = p_ref[off_w3:off_w3 + lane, :]                 # (lane, lane), col 0 live
    b3 = p_ref[off_b3:off_b3 + 1, :]

    h1 = jnp.dot(x, w1, preferred_element_type=jnp.float32) + b1
    h1 = jnp.maximum(h1, 0.0)                           # ReLU (padded lanes stay 0)
    h2 = jnp.dot(h1, w2, preferred_element_type=jnp.float32) + b2
    h2 = jnp.maximum(h2, 0.0)
    out = jnp.dot(h2, w3, preferred_element_type=jnp.float32) + b3
    o_ref[...] = out.astype(o_ref.dtype)                # lane-dense store; col 0 = fc3


# ----------------------------------------------------------------------------
# Wrapper: pads the batch, grids over it, keeps weights VMEM-resident, and
# slices the real (B, 1) result out of the lane-dense output.
# ----------------------------------------------------------------------------
def regression_model_forward(x, packed):
    lane = packed.shape[1]
    in_p = packed.shape[0] - 3 * BIAS_ROWS - 2 * lane   # invert pack_params layout
    B, input_size = x.shape

    # Batch tiling: grid over the batch (parallel across v7x cores / pipelined).
    tb = min(_round_up(B, 8), MAX_BATCH_TILE)
    b_pad = _round_up(B, tb)
    x_p = jnp.pad(x, ((0, b_pad - B), (0, in_p - input_size))).astype(jnp.float32)
    grid = (b_pad // tb,)

    kernel = functools.partial(_mlp_kernel, in_p=in_p, lane=lane)

    flops = 2 * b_pad * (in_p * lane + lane * lane + lane * lane)
    bytes_accessed = (x_p.size + packed.size + b_pad * lane) * 4

    out = pl.pallas_call(
        kernel,
        out_shape=jax.ShapeDtypeStruct((b_pad, lane), jnp.float32),
        grid=grid,
        in_specs=[
            pl.BlockSpec((tb, in_p), lambda i: (i, 0)),          # batch tile of x
            pl.BlockSpec(packed.shape, lambda i: (0, 0)),        # whole param blob, resident
        ],
        out_specs=pl.BlockSpec((tb, lane), lambda i: (i, 0)),    # lane-dense output tile
        compiler_params=pltpu.CompilerParams(
            dimension_semantics=("parallel",),
        ),
        cost_estimate=pl.CostEstimate(
            flops=flops, transcendentals=0, bytes_accessed=bytes_accessed
        ),
    )(x_p, packed)

    return out[:B, 0:1]


# ----------------------------------------------------------------------------
# Pure-JAX reference for correctness checking.
# ----------------------------------------------------------------------------
def reference_forward(x, params):
    w1, b1, w2, b2, w3, b3 = params
    h1 = jnp.maximum(x @ w1 + b1, 0.0)
    h2 = jnp.maximum(h1 @ w2 + b2, 0.0)
    return h2 @ w3 + b3


if __name__ == "__main__":
    input_size = 16
    hidden_size = 32

    key = jax.random.PRNGKey(0)
    kx, kp, kx2 = jax.random.split(key, 3)
    params = init_params(kp, input_size, hidden_size)
    packed = pack_params(params)            # pack once, reuse across forward calls

    # Small batch (single grid step).
    batch = 8
    x = jax.random.normal(kx, (batch, input_size), jnp.float32)
    out = jax.block_until_ready(regression_model_forward(x, packed))
    ref = reference_forward(x, params)
    assert out.shape == (batch, 1), out.shape
    assert jnp.allclose(out, ref, atol=1e-5, rtol=1e-5)

    # Larger, non-multiple batch exercising the batch grid + padding path.
    batch2 = 600
    x2 = jax.random.normal(kx2, (batch2, input_size), jnp.float32)
    out2 = jax.block_until_ready(regression_model_forward(x2, packed))
    ref2 = reference_forward(x2, params)
    assert out2.shape == (batch2, 1), out2.shape
    assert jnp.allclose(out2, ref2, atol=1e-5, rtol=1e-5)

    print("KERNEL_OK")
</pallas_src>

<mosaic_0001>
module attributes {stable_mosaic.version = 11 : i64} {
  func.func @_mlp_kernel(%arg0: i32, %arg1: memref<8x16xf32, #tpu.memory_space<vmem>>, %arg2: memref<296x128xf32, #tpu.memory_space<vmem>>, %arg3: memref<8x128xf32, #tpu.memory_space<vmem>>) attributes {dimension_semantics = [#tpu.dimension_semantics<parallel>], iteration_bounds = array<i64: 1>, scalar_prefetch = 0 : i64, scratch_operands = 0 : i64, tpu.core_type = #tpu.core_type<tc>, window_params = [{transform_indices = @transform_0, window_bounds = array<i64: 8, 16>}, {pipeline_mode = #tpu.pipeline_mode<synchronous>, transform_indices = @transform_1, window_bounds = array<i64: 296, 128>}, {transform_indices = @transform_2, window_bounds = array<i64: 8, 128>}]} {
    %c0 = arith.constant 0 : index
    %c0_0 = arith.constant 0 : index
    %0 = vector.load %arg1[%c0, %c0_0] : memref<8x16xf32, #tpu.memory_space<vmem>>, vector<8x16xf32>
    %c0_1 = arith.constant 0 : index
    %c0_2 = arith.constant 0 : index
    %1 = vector.load %arg2[%c0_1, %c0_2] : memref<296x128xf32, #tpu.memory_space<vmem>>, vector<16x128xf32>
    %c16 = arith.constant 16 : index
    %c0_3 = arith.constant 0 : index
    %2 = vector.load %arg2[%c16, %c0_3] : memref<296x128xf32, #tpu.memory_space<vmem>>, vector<1x128xf32>
    %c24 = arith.constant 24 : index
    %c0_4 = arith.constant 0 : index
    %3 = vector.load %arg2[%c24, %c0_4] : memref<296x128xf32, #tpu.memory_space<vmem>>, vector<128x128xf32>
    %c152 = arith.constant 152 : index
    %c0_5 = arith.constant 0 : index
    %4 = vector.load %arg2[%c152, %c0_5] : memref<296x128xf32, #tpu.memory_space<vmem>>, vector<1x128xf32>
    %c160 = arith.constant 160 : index
    %c0_6 = arith.constant 0 : index
    %5 = vector.load %arg2[%c160, %c0_6] : memref<296x128xf32, #tpu.memory_space<vmem>>, vector<128x128xf32>
    %c288 = arith.constant 288 : index
    %c0_7 = arith.constant 0 : index
    %6 = vector.load %arg2[%c288, %c0_7] : memref<296x128xf32, #tpu.memory_space<vmem>>, vector<1x128xf32>
    %cst = arith.constant dense<0.000000e+00> : vector<8x128xf32>
    %7 = tpu.matmul %0, %1, %cst {dimension_numbers = #tpu.dot_dimension_numbers<[1], [0], [0], [1], [0, 0, 1, 1], [], []>} : vector<8x16xf32>, vector<16x128xf32>, vector<8x128xf32> -> vector<8x128xf32>
    %8 = vector.broadcast %2 : vector<1x128xf32> to vector<8x128xf32>
    %9 = arith.addf %7, %8 : vector<8x128xf32>
    %cst_8 = arith.constant 0.000000e+00 : f32
    %10 = vector.broadcast %cst_8 : f32 to vector<8x128xf32>
    %11 = arith.maximumf %9, %10 : vector<8x128xf32>
    %cst_9 = arith.constant dense<0.000000e+00> : vector<8x128xf32>
    %12 = tpu.matmul %11, %3, %cst_9 {dimension_numbers = #tpu.dot_dimension_numbers<[1], [0], [0], [1], [0, 0, 1, 1], [], []>} : vector<8x128xf32>, vector<128x128xf32>, vector<8x128xf32> -> vector<8x128xf32>
    %13 = vector.broadcast %4 : vector<1x128xf32> to vector<8x128xf32>
    %14 = arith.addf %12, %13 : vector<8x128xf32>
    %cst_10 = arith.constant 0.000000e+00 : f32
    %15 = vector.broadcast %cst_10 : f32 to vector<8x128xf32>
    %16 = arith.maximumf %14, %15 : vector<8x128xf32>
    %cst_11 = arith.constant dense<0.000000e+00> : vector<8x128xf32>
    %17 = tpu.matmul %16, %5, %cst_11 {dimension_numbers = #tpu.dot_dimension_numbers<[1], [0], [0], [1], [0, 0, 1, 1], [], []>} : vector<8x128xf32>, vector<128x128xf32>, vector<8x128xf32> -> vector<8x128xf32>
    %18 = vector.broadcast %6 : vector<1x128xf32> to vector<8x128xf32>
    %19 = arith.addf %17, %18 : vector<8x128xf32>
    %c0_12 = arith.constant 0 : index
    %c0_13 = arith.constant 0 : index
    %20 = vector.load %arg3[%c0_12, %c0_13] : memref<8x128xf32, #tpu.memory_space<vmem>>, vector<8x128xf32>
    tpu.vector_store %arg3[%c0_12, %c0_13], %19 {strides = array<i32>} : memref<8x128xf32, #tpu.memory_space<vmem>>, vector<8x128xf32>,
    return
  }
  func.func @transform_0(%arg0: i32) -> (i32, i32) {
    %c0_i32 = arith.constant 0 : i32
    %c0_i32_0 = arith.constant 0 : i32
    return %arg0, %c0_i32 : i32, i32
  }
  func.func @transform_1(%arg0: i32) -> (i32, i32) {
    %c0_i32 = arith.constant 0 : i32
    %c0_i32_0 = arith.constant 0 : i32
    %c0_i32_1 = arith.constant 0 : i32
    return %c0_i32, %c0_i32_0 : i32, i32
  }
  func.func @transform_2(%arg0: i32) -> (i32, i32) {
    %c0_i32 = arith.constant 0 : i32
    %c0_i32_0 = arith.constant 0 : i32
    return %arg0, %c0_i32 : i32, i32
  }
}

</mosaic_0001>

<llo_original>
// kernel: tpu_custom_call.1
$region0: #{tpu_custom_call.1}
  #allocation0 [shape = 'u32[]', space=smem, size = 0x4, offset = 0x4, fixed_abs, tag = 'smem constant byte address 0x4 - core index']
  #allocation1 [shape = 'u32[144,128]{1,0:T(1,128)}', space=vmem, size = 0x12000, scoped, tag = 'internal scratch']
  %s0 = inlined_call_operand.hbm [shape: f32[8,16], index: 0, kind: input, shape index: {}]
  %s1 = inlined_call_operand.hbm [shape: f32[296,128], index: 1, kind: input, shape index: {}]
  %s2 = inlined_call_operand.hbm [shape: f32[8,128], index: 2, kind: output, shape index: {}]
  %s3 = sld [smem:[#allocation0]]
  $region26: #{tpu_custom_call.1} parent=0
    _
  %s5 = ssub.s32 1, %s3
  %s6 = scalar_select 0, %s5, %s3
  $region1: #{tpu_custom_call.1} parent=0
    #allocation2 [shape = 'u8[4096]{0}', space=vmem, size = 0x1000, scoped, tag = 'input window, operand 0, single buffered']
    #allocation3 [shape = 's32[1]{0}', space=sflag, size = 0x4, scoped, tag = 'scoped memory for tpu_custom_call.1']
    #allocation4 [shape = 's32[1]{0}', space=sflag, size = 0x4, scoped, tag = 'scoped memory for tpu_custom_call.1']
    #allocation5 [shape = 'u8[151552]{0}', space=vmem, size = 0x25000, scoped, tag = 'input window, operand 1, single buffered']
    #allocation6 [shape = 's32[1]{0}', space=sflag, size = 0x4, scoped, tag = 'scoped memory for tpu_custom_call.1']
    #allocation7 [shape = 'u8[4096]{0}', space=vmem, size = 0x1000, scoped, tag = 'output window, operand 0, single buffered']
    %7 = vsyncpa [#allocation3], 0
    %8 = vsyncpa [#allocation6], 0
    %9 = vsyncpa [#allocation4], 0
    // Predicated region
    $region2: #{tpu_custom_call.1} parent=1 // pred_check
      _
    $region3: #{tpu_custom_call.1} parent=1 // pred_check_branch
      %11 = sbr.rel (0) target = $region5
    $region4: #{tpu_custom_call.1} parent=1 // pred_region
      %s13 = ssub.s32 128, 128
      %14 = vsyncadd [#allocation3], %s13
      %s16 = sshll.u32 [#allocation2], 4
      %s17 = int_to_ptr.vmem [resolvable:$true] %s16
      %19 = dma.hbm_to_vmem [thread:$0]  %s0, 128, %s17, [#allocation3]
    $region5: #{tpu_custom_call.1} parent=1 // pred_fallthru
      _
    // Predicated region
    $region6: #{tpu_custom_call.1} parent=1 // pred_check
      _
    $region7: #{tpu_custom_call.1} parent=1 // pred_check_branch
      %21 = sbr.rel (0) target = $region9
    $region8: #{tpu_custom_call.1} parent=1 // pred_region
      %s23 = ssub.s32 4736, 4736
      %24 = vsyncadd [#allocation6], %s23
      %s25 = sshll.u32 [#allocation5], 4
      %s26 = int_to_ptr.vmem [resolvable:$true] %s25
      %31 = dma.hbm_to_vmem [thread:$0]  %s1, 4736, %s26, [#allocation6], 128, 128, 8
    $region9: #{tpu_custom_call.1} parent=1 // pred_fallthru
      _
    // Predicated region
    $region10: #{tpu_custom_call.1} parent=1 // pred_check
      _
    $region11: #{tpu_custom_call.1} parent=1 // pred_check_branch
      %33 = sbr.rel (0) target = $region13
    $region12: #{tpu_custom_call.1} parent=1 // pred_region
      %34 = dma.done [#allocation3], 128
    $region13: #{tpu_custom_call.1} parent=1 // pred_fallthru
      _
    // Predicated region
    $region14: #{tpu_custom_call.1} parent=1 // pred_check
      _
    $region15: #{tpu_custom_call.1} parent=1 // pred_check_branch
      %36 = sbr.rel (0) target = $region17
    $region16: #{tpu_custom_call.1} parent=1 // pred_region
      %37 = dma.done [#allocation6], 4736
    $region17: #{tpu_custom_call.1} parent=1 // pred_fallthru
      _
    %v38 = vld [vmem:[#allocation2] sm:$0xff]
    %v39 = vld [vmem:[#allocation5] sm:$0xff]
    %v40 = vld [vmem:[#allocation5 + $0x8] sm:$0xff]
    %v41 = vld [vmem:[#allocation5 + $0x10] sm:$0x1]
    %v42 = vld [vmem:[#allocation5 + $0x18] sm:$0xff]
    %v43 = vld [vmem:[#allocation5 + $0x20] sm:$0xff]
    %v44 = vld [vmem:[#allocation5 + $0x28] sm:$0xff]
    %v45 = vld [vmem:[#allocation5 + $0x30] sm:$0xff]
    %v46 = vld [vmem:[#allocation5 + $0x38] sm:$0xff]
    %v47 = vld [vmem:[#allocation5 + $0x40] sm:$0xff]
    %v48 = vld [vmem:[#allocation5 + $0x48] sm:$0xff]
    %v49 = vld [vmem:[#allocation5 + $0x50] sm:$0xff]
    %v50 = vld [vmem:[#allocation5 + $0x58] sm:$0xff]
    %v51 = vld [vmem:[#allocation5 + $0x60] sm:$0xff]
    %v52 = vld [vmem:[#allocation5 + $0x68] sm:$0xff]
    %v53 = vld [vmem:[#allocation5 + $0x70] sm:$0xff]
    %v54 = vld [vmem:[#allocation5 + $0x78] sm:$0xff]
    %v55 = vld [vmem:[#allocation5 + $0x80] sm:$0xff]
    %v56 = vld [vmem:[#allocation5 + $0x88] sm:$0xff]
    %v57 = vld [vmem:[#allocation5 + $0x90] sm:$0xff]
    %v58 = vld [vmem:[#allocation5 + $0x98] sm:$0x1]
    %v59 = vld [vmem:[#allocation5 + $0xa0] sm:$0xff]
    %v60 = vld [vmem:[#allocation5 + $0xa8] sm:$0xff]
    %v61 = vld [vmem:[#allocation5 + $0xb0] sm:$0xff]
    %v62 = vld [vmem:[#allocation5 + $0xb8] sm:$0xff]
    %v63 = vld [vmem:[#allocation5 + $0xc0] sm:$0xff]
    %v64 = vld [vmem:[#allocation5 + $0xc8] sm:$0xff]
    %v65 = vld [vmem:[#allocation5 + $0xd0] sm:$0xff]
    %v66 = vld [vmem:[#allocation5 + $0xd8] sm:$0xff]
    %v67 = vld [vmem:[#allocation5 + $0xe0] sm:$0xff]
    %v68 = vld [vmem:[#allocation5 + $0xe8] sm:$0xff]
    %v69 = vld [vmem:[#allocation5 + $0xf0] sm:$0xff]
    %v70 = vld [vmem:[#allocation5 + $0xf8] sm:$0xff]
    %v71 = vld [vmem:[#allocation5 + $0x100] sm:$0xff]
    %v72 = vld [vmem:[#allocation5 + $0x108] sm:$0xff]
    %v73 = vld [vmem:[#allocation5 + $0x110] sm:$0xff]
    %v74 = vld [vmem:[#allocation5 + $0x118] sm:$0xff]
    %v75 = vld [vmem:[#allocation5 + $0x120] sm:$0x1]
    %v76 = vlaneseq
    %v77 = vshrl.u32 %v76, 7
    %v78 = vsub.s32 0, %v77
    %v79 = vrot.slane %v41, %v78
    %vm80 = vcmask 130048
    %v82 = vsel %vm80, %v38, 0
    %84 = vmatprep.subr.mxu0 0.0
    %85 = vmatpush1.msra.mxu0 %v39
    %86 = vmatprep.subr.mxu0 0.0
    %87 = vmatpush1.msra.mxu0 %v40
    %88 = vmatprep.subr.mxu0 0.0
    %89 = vmatpush1.msra.mxu0 0.0
    %90 = vmatprep.subr.mxu0 0.0
    %91 = vmatpush1.msra.mxu0 0.0
    %92 = vmatprep.subr.mxu0 0.0
    %93 = vmatpush1.msra.mxu0 0.0
    %94 = vmatprep.subr.mxu0 0.0
    %95 = vmatpush1.msra.mxu0 0.0
    %96 = vmatprep.subr.mxu0 0.0
    %97 = vmatpush1.msra.mxu0 0.0
    %98 = vmatprep.subr.mxu0 0.0
    %99 = vmatpush1.msra.mxu0 0.0
    %100 = vmatprep.subr.mxu0 0.0
    %101 = vmatpush1.msra.mxu0 0.0
    %102 = vmatprep.subr.mxu0 0.0
    %103 = vmatpush1.msra.mxu0 0.0
    %104 = vmatprep.subr.mxu0 0.0
    %105 = vmatpush1.msra.mxu0 0.0
    %106 = vmatprep.subr.mxu0 0.0
    %107 = vmatpush1.msra.mxu0 0.0
    %108 = vmatprep.subr.mxu0 0.0
    %109 = vmatpush1.msra.mxu0 0.0
    %110 = vmatprep.subr.mxu0 0.0
    %111 = vmatpush1.msra.mxu0 0.0
    %112 = vmatprep.subr.mxu0 0.0
    %113 = vmatpush1.msra.mxu0 0.0
    %114 = vmatprep.subr.mxu0 0.0
    %115 = vmatpush1.msra.mxu0 0.0
    %116 = vmatprep.subr.mxu0 0.0
    %117 = vmatpush1.msra.mxu0 0.0
    %118 = vmatprep.subr.mxu0 0.0
    %119 = vmatpush1.msra.mxu0 0.0
    %120 = vmatprep.subr.mxu0 0.0
    %121 = vmatpush1.msra.mxu0 0.0
    %122 = vmatprep.subr.mxu0 0.0
    %123 = vmatpush1.msra.mxu0 0.0
    %124 = vmatprep.subr.mxu0 0.0
    %125 = vmatpush1.msra.mxu0 0.0
    %126 = vmatprep.subr.mxu0 0.0
    %127 = vmatpush1.msra.mxu0 0.0
    %128 = vmatprep.subr.mxu0 0.0
    %129 = vmatpush1.msra.mxu0 0.0
    %130 = vmatprep.subr.mxu0 0.0
    %131 = vmatpush1.msra.mxu0 0.0
    %132 = vmatprep.subr.mxu0 0.0
    %133 = vmatpush1.msra.mxu0 0.0
    %134 = vmatprep.subr.mxu0 0.0
    %135 = vmatpush1.msra.mxu0 0.0
    %136 = vmatprep.subr.mxu0 0.0
    %137 = vmatpush1.msra.mxu0 0.0
    %138 = vmatprep.subr.mxu0 0.0
    %139 = vmatpush1.msra.mxu0 0.0
    %140 = vmatprep.subr.mxu0 0.0
    %141 = vmatpush1.msra.mxu0 0.0
    %142 = vmatprep.subr.mxu0 0.0
    %143 = vmatpush1.msra.mxu0 0.0
    %144 = vmatprep.subr.mxu0 0.0
    %145 = vmatpush1.msra.mxu0 0.0
    %146 = vmatprep.subr.mxu0 0.0
    %147 = vmatpush1.msra.mxu0 0.0
    %148 = vmatprep.mubr.f32.mxu0 0.0
    %149 = vmatmul.mubr.f32.gmra.mrb[0].mxu0 %v82
    %v150 = vpop.f32.mrb[0].mxu0
    %v151 = vadd.f32 %v79, %v150
    %v152 = vpop.f32.mrb[0].mxu0
    %153 = vdwg.mxu0
    %v154 = vmax.f32 %v151, 0.0
    %v155 = vlaneseq
    %v156 = vshrl.u32 %v155, 7
    %v157 = vsub.s32 0, %v156
    %v158 = vrot.slane %v58, %v157
    %159 = vmatprep.subr.mxu0 0.0
    %160 = vmatpush1.msra.mxu0 %v42
    %161 = vmatprep.subr.mxu0 0.0
    %162 = vmatpush1.msra.mxu0 %v43
    %163 = vmatprep.subr.mxu0 0.0
    %164 = vmatpush1.msra.mxu0 %v44
    %165 = vmatprep.subr.mxu0 0.0
    %166 = vmatpush1.msra.mxu0 %v45
    %167 = vmatprep.subr.mxu0 0.0
    %168 = vmatpush1.msra.mxu0 %v46
    %169 = vmatprep.subr.mxu0 0.0
    %170 = vmatpush1.msra.mxu0 %v47
    %171 = vmatprep.subr.mxu0 0.0
    %172 = vmatpush1.msra.mxu0 %v48
    %173 = vmatprep.subr.mxu0 0.0
    %174 = vmatpush1.msra.mxu0 %v49
    %175 = vmatprep.subr.mxu0 0.0
    %176 = vmatpush1.msra.mxu0 %v50
    %177 = vmatprep.subr.mxu0 0.0
    %178 = vmatpush1.msra.mxu0 %v51
    %179 = vmatprep.subr.mxu0 0.0
    %180 = vmatpush1.msra.mxu0 %v52
    %181 = vmatprep.subr.mxu0 0.0
    %182 = vmatpush1.msra.mxu0 %v53
    %183 = vmatprep.subr.mxu0 0.0
    %184 = vmatpush1.msra.mxu0 %v54
    %185 = vmatprep.subr.mxu0 0.0
    %186 = vmatpush1.msra.mxu0 %v55
    %187 = vmatprep.subr.mxu0 0.0
    %188 = vmatpush1.msra.mxu0 %v56
    %189 = vmatprep.subr.mxu0 0.0
    %190 = vmatpush1.msra.mxu0 %v57
    %191 = vmatprep.subr.mxu0 0.0
    %192 = vmatpush1.msra.mxu0 0.0
    %193 = vmatprep.subr.mxu0 0.0
    %194 = vmatpush1.msra.mxu0 0.0
    %195 = vmatprep.subr.mxu0 0.0
    %196 = vmatpush1.msra.mxu0 0.0
    %197 = vmatprep.subr.mxu0 0.0
    %198 = vmatpush1.msra.mxu0 0.0
    %199 = vmatprep.subr.mxu0 0.0
    %200 = vmatpush1.msra.mxu0 0.0
    %201 = vmatprep.subr.mxu0 0.0
    %202 = vmatpush1.msra.mxu0 0.0
    %203 = vmatprep.subr.mxu0 0.0
    %204 = vmatpush1.msra.mxu0 0.0
    %205 = vmatprep.subr.mxu0 0.0
    %206 = vmatpush1.msra.mxu0 0.0
    %207 = vmatprep.subr.mxu0 0.0
    %208 = vmatpush1.msra.mxu0 0.0
    %209 = vmatprep.subr.mxu0 0.0
    %210 = vmatpush1.msra.mxu0 0.0
    %211 = vmatprep.subr.mxu0 0.0
    %212 = vmatpush1.msra.mxu0 0.0
    %213 = vmatprep.subr.mxu0 0.0
    %214 = vmatpush1.msra.mxu0 0.0
    %215 = vmatprep.subr.mxu0 0.0
    %216 = vmatpush1.msra.mxu0 0.0
    %217 = vmatprep.subr.mxu0 0.0
    %218 = vmatpush1.msra.mxu0 0.0
    %219 = vmatprep.subr.mxu0 0.0
    %220 = vmatpush1.msra.mxu0 0.0
    %221 = vmatprep.subr.mxu0 0.0
    %222 = vmatpush1.msra.mxu0 0.0
    %223 = vmatprep.mubr.f32.mxu0 0.0
    %224 = vmatmul.mubr.f32.gmra.mrb[0].mxu0 %v154
    %v225 = vpop.f32.mrb[0].mxu0
    %v226 = vadd.f32 %v158, %v225
    %v227 = vpop.f32.mrb[0].mxu0
    %228 = vdwg.mxu0
    %v229 = vmax.f32 %v226, 0.0
    %v230 = vlaneseq
    %v231 = vshrl.u32 %v230, 7
    %v232 = vsub.s32 0, %v231
    %v233 = vrot.slane %v75, %v232
    %234 = vmatprep.subr.mxu0 0.0
    %235 = vmatpush1.msra.mxu0 %v59
    %236 = vmatprep.subr.mxu0 0.0
    %237 = vmatpush1.msra.mxu0 %v60
    %238 = vmatprep.subr.mxu0 0.0
    %239 = vmatpush1.msra.mxu0 %v61
    %240 = vmatprep.subr.mxu0 0.0
    %241 = vmatpush1.msra.mxu0 %v62
    %242 = vmatprep.subr.mxu0 0.0
    %243 = vmatpush1.msra.mxu0 %v63
    %244 = vmatprep.subr.mxu0 0.0
    %245 = vmatpush1.msra.mxu0 %v64
    %246 = vmatprep.subr.mxu0 0.0
    %247 = vmatpush1.msra.mxu0 %v65
    %248 = vmatprep.subr.mxu0 0.0
    %249 = vmatpush1.msra.mxu0 %v66
    %250 = vmatprep.subr.mxu0 0.0
    %251 = vmatpush1.msra.mxu0 %v67
    %252 = vmatprep.subr.mxu0 0.0
    %253 = vmatpush1.msra.mxu0 %v68
    %254 = vmatprep.subr.mxu0 0.0
    %255 = vmatpush1.msra.mxu0 %v69
    %256 = vmatprep.subr.mxu0 0.0
    %257 = vmatpush1.msra.mxu0 %v70
    %258 = vmatprep.subr.mxu0 0.0
    %259 = vmatpush1.msra.mxu0 %v71
    %260 = vmatprep.subr.mxu0 0.0
    %261 = vmatpush1.msra.mxu0 %v72
    %262 = vmatprep.subr.mxu0 0.0
    %263 = vmatpush1.msra.mxu0 %v73
    %264 = vmatprep.subr.mxu0 0.0
    %265 = vmatpush1.msra.mxu0 %v74
    %266 = vmatprep.subr.mxu0 0.0
    %267 = vmatpush1.msra.mxu0 0.0
    %268 = vmatprep.subr.mxu0 0.0
    %269 = vmatpush1.msra.mxu0 0.0
    %270 = vmatprep.subr.mxu0 0.0
    %271 = vmatpush1.msra.mxu0 0.0
    %272 = vmatprep.subr.mxu0 0.0
    %273 = vmatpush1.msra.mxu0 0.0
    %274 = vmatprep.subr.mxu0 0.0
    %275 = vmatpush1.msra.mxu0 0.0
    %276 = vmatprep.subr.mxu0 0.0
    %277 = vmatpush1.msra.mxu0 0.0
    %278 = vmatprep.subr.mxu0 0.0
    %279 = vmatpush1.msra.mxu0 0.0
    %280 = vmatprep.subr.mxu0 0.0
    %281 = vmatpush1.msra.mxu0 0.0
    %282 = vmatprep.subr.mxu0 0.0
    %283 = vmatpush1.msra.mxu0 0.0
    %284 = vmatprep.subr.mxu0 0.0
    %285 = vmatpush1.msra.mxu0 0.0
    %286 = vmatprep.subr.mxu0 0.0
    %287 = vmatpush1.msra.mxu0 0.0
    %288 = vmatprep.subr.mxu0 0.0
    %289 = vmatpush1.msra.mxu0 0.0
    %290 = vmatprep.subr.mxu0 0.0
    %291 = vmatpush1.msra.mxu0 0.0
    %292 = vmatprep.subr.mxu0 0.0
    %293 = vmatpush1.msra.mxu0 0.0
    %294 = vmatprep.subr.mxu0 0.0
    %295 = vmatpush1.msra.mxu0 0.0
    %296 = vmatprep.subr.mxu0 0.0
    %297 = vmatpush1.msra.mxu0 0.0
    %298 = vmatprep.mubr.f32.mxu0 0.0
    %299 = vmatmul.mubr.f32.gmra.mrb[0].mxu0 %v229
    %v300 = vpop.f32.mrb[0].mxu0
    %v301 = vadd.f32 %v233, %v300
    %v302 = vpop.f32.mrb[0].mxu0
    %303 = vdwg.mxu0
    %304 = vst [vmem:[#allocation7] sm:$0xff] %v301
    // Predicated region
    $region18: #{tpu_custom_call.1} parent=1 // pred_check
      _
    $region19: #{tpu_custom_call.1} parent=1 // pred_check_branch
      %306 = sbr.rel (0) target = $region21
    $region20: #{tpu_custom_call.1} parent=1 // pred_region
      %s308 = ssub.s32 128, 128
      %309 = vsyncadd [#allocation4], %s308
      %s311 = sshll.u32 [#allocation7], 4
      %s312 = int_to_ptr.vmem [resolvable:$true] %s311
      %314 = dma.vmem_to_hbm [thread:$0]  %s312, 128, %s2, [#allocation4]
    $region21: #{tpu_custom_call.1} parent=1 // pred_fallthru
      _
    // Predicated region
    $region22: #{tpu_custom_call.1} parent=1 // pred_check
      _
    $region23: #{tpu_custom_call.1} parent=1 // pred_check_branch
      %316 = sbr.rel (0) target = $region25
    $region24: #{tpu_custom_call.1} parent=1 // pred_region
      %317 = dma.done [#allocation4], 128
    $region25: #{tpu_custom_call.1} parent=1 // pred_fallthru
      _
    %318 = vsyncpa [#allocation3], 1
    %319 = vsyncpa [#allocation6], 1
    %320 = vsyncpa [#allocation4], 1

</llo_original>
